<compile_context>
chip_gen: v7x
topology: tpu7x:2x2x1
jax: 0.10.0
libtpu: 0.0.40
codegen_flags: <defaults>
</compile_context>

<pallas_src>
import functools

import jax
import jax.numpy as jnp
from jax.experimental import pallas as pl
from jax.experimental.pallas import tpu as pltpu


def _round_up(n, m):
    return ((n + m - 1) // m) * m


def _mlp_kernel(x_ref, w1_ref, b1_ref, w2_ref, b2_ref, w3_ref, b3_ref, o_ref):
    # Layer 1: Linear (bf16 MXU matmul, f32 accumulate) + bias + ReLU in f32.
    h = jnp.dot(x_ref[...], w1_ref[...], preferred_element_type=jnp.float32)
    h = jnp.maximum(h + b1_ref[...], 0.0)
    # Layer 2: Linear + ReLU.
    h = jnp.dot(h.astype(w2_ref.dtype), w2_ref[...],
                preferred_element_type=jnp.float32)
    h = jnp.maximum(h + b2_ref[...], 0.0)
    # Layer 3: Linear (no activation).
    h = jnp.dot(h.astype(w3_ref.dtype), w3_ref[...],
                preferred_element_type=jnp.float32)
    o_ref[...] = (h + b3_ref[...]).astype(o_ref.dtype)


@functools.partial(jax.jit, static_argnames=("batch_tile", "compute_dtype"))
def neural_net_forward(x, w1, b1, w2, b2, w3, b3, *,
                       batch_tile=512, compute_dtype=jnp.bfloat16):
    B, in_size = x.shape
    hidden = w1.shape[1]
    num_classes = w3.shape[1]

    LANE = 128
    SUBLANE = 8

    # Lane-dense (128-multiple) padded feature dims.
    in_p = _round_up(in_size, LANE)
    hid_p = _round_up(hidden, LANE)
    cls_p = _round_up(num_classes, LANE)

    # Batch tile: as large as requested, but a multiple of 8 sublanes and small
    # enough to give >=2 grid steps when the batch allows it (v7x megacore).
    two_step_cap = max(SUBLANE, _round_up(pl.cdiv(B, 2), SUBLANE))
    bt = max(SUBLANE, _round_up(min(batch_tile, two_step_cap), SUBLANE))
    B_p = _round_up(B, bt)
    grid = (B_p // bt,)

    # Zero-pad operands once in the wrapper (weights are loaded once; padded
    # rows/cols are exact zeros so they never affect valid outputs).
    cd = compute_dtype
    xp = jnp.zeros((B_p, in_p), cd).at[:B, :in_size].set(x.astype(cd))
    w1p = jnp.zeros((in_p, hid_p), cd).at[:in_size, :hidden].set(w1.astype(cd))
    w2p = jnp.zeros((hid_p, hid_p), cd).at[:hidden, :hidden].set(w2.astype(cd))
    w3p = jnp.zeros((hid_p, cls_p), cd).at[:hidden, :num_classes].set(w3.astype(cd))
    b1p = jnp.zeros((1, hid_p), jnp.float32).at[:, :hidden].set(
        b1.reshape(1, -1).astype(jnp.float32))
    b2p = jnp.zeros((1, hid_p), jnp.float32).at[:, :hidden].set(
        b2.reshape(1, -1).astype(jnp.float32))
    b3p = jnp.zeros((1, cls_p), jnp.float32).at[:, :num_classes].set(
        b3.reshape(1, -1).astype(jnp.float32))

    # Explicit VMEM budget (double-buffered I/O tiles + resident weights +
    # f32 intermediates, with headroom), capped at 64 MiB so it also fits v7x.
    bpe = jnp.dtype(cd).itemsize
    weight_bytes = (in_p * hid_p + hid_p * hid_p + hid_p * cls_p) * bpe
    bias_bytes = (2 * hid_p + cls_p) * 4
    io_bytes_per_step = bt * in_p * bpe + bt * cls_p * 4
    vmem_need = 2 * (weight_bytes + bias_bytes + io_bytes_per_step) + 4 * bt * hid_p * 4
    vmem_limit = int(min(64 * 2**20, max(32 * 2**20, 2 * vmem_need)))

    cost = pl.CostEstimate(
        flops=2 * B_p * (in_p * hid_p + hid_p * hid_p + hid_p * cls_p),
        transcendentals=0,
        bytes_accessed=(B_p * in_p * bpe + weight_bytes + bias_bytes
                        + B_p * cls_p * 4),
    )

    out_padded = pl.pallas_call(
        _mlp_kernel,
        out_shape=jax.ShapeDtypeStruct((B_p, cls_p), jnp.float32),
        grid_spec=pltpu.PrefetchScalarGridSpec(
            num_scalar_prefetch=0,
            grid=grid,
            in_specs=[
                pl.BlockSpec((bt, in_p), lambda i: (i, 0)),       # x tile
                pl.BlockSpec((in_p, hid_p), lambda i: (0, 0)),    # W1 (resident)
                pl.BlockSpec((1, hid_p), lambda i: (0, 0)),       # b1
                pl.BlockSpec((hid_p, hid_p), lambda i: (0, 0)),   # W2 (resident)
                pl.BlockSpec((1, hid_p), lambda i: (0, 0)),       # b2
                pl.BlockSpec((hid_p, cls_p), lambda i: (0, 0)),   # W3 (resident)
                pl.BlockSpec((1, cls_p), lambda i: (0, 0)),       # b3
            ],
            out_specs=pl.BlockSpec((bt, cls_p), lambda i: (i, 0)),  # lane-dense
        ),
        compiler_params=pltpu.CompilerParams(
            dimension_semantics=("parallel",),
            vmem_limit_bytes=vmem_limit,
        ),
        cost_estimate=cost,
    )(xp, w1p, b1p, w2p, b2p, w3p, b3p)

    # Strip batch and class padding.
    return out_padded[:B, :num_classes]


def _init_linear(key, fan_in, fan_out):
    """Deterministic init mimicking PyTorch nn.Linear default (U(+-1/sqrt(fan_in))).
    Returns weight already transposed to (fan_in, fan_out)."""
    kw, kb = jax.random.split(key)
    bound = 1.0 / jnp.sqrt(jnp.float32(fan_in))
    w = jax.random.uniform(kw, (fan_in, fan_out), jnp.float32, -bound, bound)
    b = jax.random.uniform(kb, (1, fan_out), jnp.float32, -bound, bound)
    return w, b


if __name__ == "__main__":
    # Small shapes consistent with NeuralNet(input_size=32, hidden_size=32, num_classes=16).
    # batch=13 deliberately exercises batch padding + the multi-step grid.
    batch = 13
    input_size = 32
    hidden_size = 32
    num_classes = 16

    key = jax.random.PRNGKey(0)
    kx, k1, k2, k3 = jax.random.split(key, 4)

    x = jax.random.normal(kx, (batch, input_size), jnp.float32)
    w1, b1 = _init_linear(k1, input_size, hidden_size)
    w2, b2 = _init_linear(k2, hidden_size, hidden_size)
    w3, b3 = _init_linear(k3, hidden_size, num_classes)

    out = neural_net_forward(x, w1, b1, w2, b2, w3, b3)
    out = jax.block_until_ready(out)
    assert out.shape == (batch, num_classes)

    # Reference that mimics the kernel precision (bf16 operands, f32 accumulate).
    def _mm(a, w):
        return jnp.dot(a.astype(jnp.bfloat16).astype(jnp.float32),
                       w.astype(jnp.bfloat16).astype(jnp.float32),
                       precision=jax.lax.Precision.HIGHEST)

    ref = jnp.maximum(_mm(x, w1) + b1, 0.0)
    ref = jnp.maximum(_mm(ref, w2) + b2, 0.0)
    ref = _mm(ref, w3) + b3
    assert jnp.allclose(out, ref, atol=1e-3, rtol=1e-3), "mismatch vs bf16-matched reference"

    # Loose sanity check against the pure-f32 PyTorch-equivalent forward.
    ref32 = jnp.maximum(x @ w1 + b1, 0.0)
    ref32 = jnp.maximum(ref32 @ w2 + b2, 0.0)
    ref32 = ref32 @ w3 + b3
    assert jnp.allclose(out, ref32, atol=1e-1, rtol=1e-1), "mismatch vs f32 reference"

    print("KERNEL_OK")
</pallas_src>

<mosaic_0001>
module attributes {stable_mosaic.version = 11 : i64} {
  func.func @_mlp_kernel(%arg0: i32, %arg1: memref<8x128xbf16, #tpu.memory_space<vmem>>, %arg2: memref<128x128xbf16, #tpu.memory_space<vmem>>, %arg3: memref<1x128xf32, #tpu.memory_space<vmem>>, %arg4: memref<128x128xbf16, #tpu.memory_space<vmem>>, %arg5: memref<1x128xf32, #tpu.memory_space<vmem>>, %arg6: memref<128x128xbf16, #tpu.memory_space<vmem>>, %arg7: memref<1x128xf32, #tpu.memory_space<vmem>>, %arg8: memref<8x128xf32, #tpu.memory_space<vmem>>) attributes {dimension_semantics = [#tpu.dimension_semantics<parallel>], iteration_bounds = array<i64: 2>, scalar_prefetch = 0 : i64, scratch_operands = 0 : i64, tpu.core_type = #tpu.core_type<tc>, window_params = [{transform_indices = @transform_0, window_bounds = array<i64: 8, 128>}, {pipeline_mode = #tpu.pipeline_mode<synchronous>, transform_indices = @transform_1, window_bounds = array<i64: 128, 128>}, {pipeline_mode = #tpu.pipeline_mode<synchronous>, transform_indices = @transform_2, window_bounds = array<i64: 1, 128>}, {pipeline_mode = #tpu.pipeline_mode<synchronous>, transform_indices = @transform_3, window_bounds = array<i64: 128, 128>}, {pipeline_mode = #tpu.pipeline_mode<synchronous>, transform_indices = @transform_4, window_bounds = array<i64: 1, 128>}, {pipeline_mode = #tpu.pipeline_mode<synchronous>, transform_indices = @transform_5, window_bounds = array<i64: 128, 128>}, {pipeline_mode = #tpu.pipeline_mode<synchronous>, transform_indices = @transform_6, window_bounds = array<i64: 1, 128>}, {transform_indices = @transform_7, window_bounds = array<i64: 8, 128>}]} {
    %c0 = arith.constant 0 : index
    %c0_0 = arith.constant 0 : index
    %0 = vector.load %arg1[%c0, %c0_0] : memref<8x128xbf16, #tpu.memory_space<vmem>>, vector<8x128xbf16>
    %c0_1 = arith.constant 0 : index
    %c0_2 = arith.constant 0 : index
    %1 = vector.load %arg2[%c0_1, %c0_2] : memref<128x128xbf16, #tpu.memory_space<vmem>>, vector<128x128xbf16>
    %cst = arith.constant dense<0.000000e+00> : vector<8x128xf32>
    %2 = tpu.matmul %0, %1, %cst {dimension_numbers = #tpu.dot_dimension_numbers<[1], [0], [0], [1], [0, 0, 1, 1], [], []>} : vector<8x128xbf16>, vector<128x128xbf16>, vector<8x128xf32> -> vector<8x128xf32>
    %c0_3 = arith.constant 0 : index
    %c0_4 = arith.constant 0 : index
    %3 = vector.load %arg3[%c0_3, %c0_4] : memref<1x128xf32, #tpu.memory_space<vmem>>, vector<1x128xf32>
    %4 = vector.broadcast %3 : vector<1x128xf32> to vector<8x128xf32>
    %5 = arith.addf %2, %4 : vector<8x128xf32>
    %cst_5 = arith.constant 0.000000e+00 : f32
    %6 = vector.broadcast %cst_5 : f32 to vector<8x128xf32>
    %7 = arith.maximumf %5, %6 : vector<8x128xf32>
    %8 = arith.truncf %7 : vector<8x128xf32> to vector<8x128xbf16>
    %c0_6 = arith.constant 0 : index
    %c0_7 = arith.constant 0 : index
    %9 = vector.load %arg4[%c0_6, %c0_7] : memref<128x128xbf16, #tpu.memory_space<vmem>>, vector<128x128xbf16>
    %cst_8 = arith.constant dense<0.000000e+00> : vector<8x128xf32>
    %10 = tpu.matmul %8, %9, %cst_8 {dimension_numbers = #tpu.dot_dimension_numbers<[1], [0], [0], [1], [0, 0, 1, 1], [], []>} : vector<8x128xbf16>, vector<128x128xbf16>, vector<8x128xf32> -> vector<8x128xf32>
    %c0_9 = arith.constant 0 : index
    %c0_10 = arith.constant 0 : index
    %11 = vector.load %arg5[%c0_9, %c0_10] : memref<1x128xf32, #tpu.memory_space<vmem>>, vector<1x128xf32>
    %12 = vector.broadcast %11 : vector<1x128xf32> to vector<8x128xf32>
    %13 = arith.addf %10, %12 : vector<8x128xf32>
    %cst_11 = arith.constant 0.000000e+00 : f32
    %14 = vector.broadcast %cst_11 : f32 to vector<8x128xf32>
    %15 = arith.maximumf %13, %14 : vector<8x128xf32>
    %16 = arith.truncf %15 : vector<8x128xf32> to vector<8x128xbf16>
    %c0_12 = arith.constant 0 : index
    %c0_13 = arith.constant 0 : index
    %17 = vector.load %arg6[%c0_12, %c0_13] : memref<128x128xbf16, #tpu.memory_space<vmem>>, vector<128x128xbf16>
    %cst_14 = arith.constant dense<0.000000e+00> : vector<8x128xf32>
    %18 = tpu.matmul %16, %17, %cst_14 {dimension_numbers = #tpu.dot_dimension_numbers<[1], [0], [0], [1], [0, 0, 1, 1], [], []>} : vector<8x128xbf16>, vector<128x128xbf16>, vector<8x128xf32> -> vector<8x128xf32>
    %c0_15 = arith.constant 0 : index
    %c0_16 = arith.constant 0 : index
    %19 = vector.load %arg7[%c0_15, %c0_16] : memref<1x128xf32, #tpu.memory_space<vmem>>, vector<1x128xf32>
    %20 = vector.broadcast %19 : vector<1x128xf32> to vector<8x128xf32>
    %21 = arith.addf %18, %20 : vector<8x128xf32>
    %c0_17 = arith.constant 0 : index
    %c0_18 = arith.constant 0 : index
    %22 = vector.load %arg8[%c0_17, %c0_18] : memref<8x128xf32, #tpu.memory_space<vmem>>, vector<8x128xf32>
    tpu.vector_store %arg8[%c0_17, %c0_18], %21 {strides = array<i32>} : memref<8x128xf32, #tpu.memory_space<vmem>>, vector<8x128xf32>,
    return
  }
  func.func @transform_0(%arg0: i32) -> (i32, i32) {
    %c0_i32 = arith.constant 0 : i32
    %c0_i32_0 = arith.constant 0 : i32
    return %arg0, %c0_i32 : i32, i32
  }
  func.func @transform_1(%arg0: i32) -> (i32, i32) {
    %c0_i32 = arith.constant 0 : i32
    %c0_i32_0 = arith.constant 0 : i32
    %c0_i32_1 = arith.constant 0 : i32
    return %c0_i32, %c0_i32_0 : i32, i32
  }
  func.func @transform_2(%arg0: i32) -> (i32, i32) {
    %c0_i32 = arith.constant 0 : i32
    %c0_i32_0 = arith.constant 0 : i32
    %c0_i32_1 = arith.constant 0 : i32
    return %c0_i32, %c0_i32_0 : i32, i32
  }
  func.func @transform_3(%arg0: i32) -> (i32, i32) {
    %c0_i32 = arith.constant 0 : i32
    %c0_i32_0 = arith.constant 0 : i32
    %c0_i32_1 = arith.constant 0 : i32
    return %c0_i32, %c0_i32_0 : i32, i32
  }
  func.func @transform_4(%arg0: i32) -> (i32, i32) {
    %c0_i32 = arith.constant 0 : i32
    %c0_i32_0 = arith.constant 0 : i32
    %c0_i32_1 = arith.constant 0 : i32
    return %c0_i32, %c0_i32_0 : i32, i32
  }
  func.func @transform_5(%arg0: i32) -> (i32, i32) {
    %c0_i32 = arith.constant 0 : i32
    %c0_i32_0 = arith.constant 0 : i32
    %c0_i32_1 = arith.constant 0 : i32
    return %c0_i32, %c0_i32_0 : i32, i32
  }
  func.func @transform_6(%arg0: i32) -> (i32, i32) {
    %c0_i32 = arith.constant 0 : i32
    %c0_i32_0 = arith.constant 0 : i32
    %c0_i32_1 = arith.constant 0 : i32
    return %c0_i32, %c0_i32_0 : i32, i32
  }
  func.func @transform_7(%arg0: i32) -> (i32, i32) {
    %c0_i32 = arith.constant 0 : i32
    %c0_i32_0 = arith.constant 0 : i32
    return %arg0, %c0_i32 : i32, i32
  }
}

</mosaic_0001>

<llo_original>
// kernel: neural_net_forward.1
$region0: #{neural_net_forward.1}
  #allocation0 [shape = 'u32[]', space=smem, size = 0x4, offset = 0x4, fixed_abs, tag = 'smem constant byte address 0x4 - core index']
  #allocation1 [shape = 'u32[144,128]{1,0:T(1,128)}', space=vmem, size = 0x12000, scoped, tag = 'internal scratch']
  %s0 = inlined_call_operand.vmem [shape: bf16[16,128], index: 0, kind: input, shape index: {}]
  %s1 = inlined_call_operand.vmem [shape: bf16[128,128], index: 1, kind: input, shape index: {}]
  %s2 = inlined_call_operand.vmem [shape: f32[1,128], index: 2, kind: input, shape index: {}]
  %s3 = inlined_call_operand.vmem [shape: bf16[128,128], index: 3, kind: input, shape index: {}]
  %s4 = inlined_call_operand.vmem [shape: f32[1,128], index: 4, kind: input, shape index: {}]
  %s5 = inlined_call_operand.vmem [shape: bf16[128,128], index: 5, kind: input, shape index: {}]
  %s6 = inlined_call_operand.vmem [shape: f32[1,128], index: 6, kind: input, shape index: {}]
  %s7 = inlined_call_operand.hbm [shape: f32[16,128], index: 7, kind: output, shape index: {}]
  %s8 = sld [smem:[#allocation0]]
  $region61: #{neural_net_forward.1} parent=0
    _
  %s10 = ssub.s32 1, %s8
  %s11 = scalar_select 0, %s10, %s8
  $region1: #{neural_net_forward.1} parent=0
    #allocation2 [shape = 'u8[8192]{0}', space=vmem, size = 0x2000, scoped, tag = 'output window, operand 0']
    #allocation3 [shape = 's32[2]{0}', space=sflag, size = 0x8, scoped, tag = 'scoped memory for neural_net_forward.1']
    %12 = vsyncpa [#allocation3], 0
    %s13 = scalar_lea.sflag [#allocation3], 1
    %14 = vsyncpa %s13, 0
    loop: start=0, step=1, limit=4
    $region2: #{neural_net_forward.1} parent=1 // loop_pre_header
      _
    $region3: #{neural_net_forward.1} parent=1 // loop_header
      %s16 = sphi 0, %s20
      %p17 = scmp.ge.s32.totalorder %s16, 4
      %s26 = sphi 0, %s28
      %s29 = sphi 0, %s26
      %s30 = sphi 0, %s29
      %s46 = sphi 0, %s30
      %s50 = sphi 0, %s50
      %s52 = sphi 0, %s50
      %s53 = sphi 0, %s52
      %s67 = sphi 0, %s53
      %s71 = sphi 0, %s71
      %s73 = sphi 0, %s71
      %s74 = sphi 0, %s73
      %s88 = sphi 0, %s74
      %s92 = sphi 0, %s92
      %s94 = sphi 0, %s92
      %s95 = sphi 0, %s94
      %s109 = sphi 0, %s95
      %s113 = sphi 0, %s113
      %s115 = sphi 0, %s113
      %s116 = sphi 0, %s115
      %s130 = sphi 0, %s116
      %s134 = sphi 0, %s134
      %s136 = sphi 0, %s134
      %s137 = sphi 0, %s136
      %s151 = sphi 0, %s137
      %s155 = sphi 0, %s155
      %s157 = sphi 0, %s155
      %s158 = sphi 0, %s157
      %s172 = sphi 0, %s158
      %s178 = sphi 0, %s180
      %s181 = sphi 0, %s178
      %s182 = sphi 0, %s181
      %s198 = sphi 0, %s182
    $region4: #{neural_net_forward.1} parent=1 // loop_header_branch
      %19 = sbr.rel (%p17) target = $region8
    $region5: #{neural_net_forward.1} parent=1 // loop_body
      %s21 = ssub.s32 %s16, 1
      %s22 = ssub.s32 %s16, 2
      %s23 = sadd.s32 %s16, 1
      %s24 = ssub.s32 %s16, %s23
      %p25 = scmp.eq.s32.totalorder %s24, 0
      %s27 = sadd.s32 %s26, 1
      %s28 = scalar_select %p25, %s26, %s27
      %p31 = pneg %p25
      %p32 = scmp.eq.s32.totalorder %s16, 1
      %p33 = por %p31, %p32
      %p34 = scmp.ne.s32.totalorder %s26, %s29
      %p35 = scmp.eq.s32.totalorder %s16, 0
      %p36 = por %p34, %p35
      %p37 = scmp.ne.s32.totalorder %s26, %s29
      %p38 = scmp.eq.s32.totalorder %s21, 1
      %p39 = por %p37, %p38
      %p40 = scmp.ne.s32.totalorder %s29, %s30
      %p41 = scmp.eq.s32.totalorder %s21, 0
      %p42 = por %p40, %p41
      %p43 = scmp.ne.s32.totalorder %s29, %s30
      %p44 = scmp.eq.s32.totalorder %s22, 1
      %p45 = por %p43, %p44
      %p47 = scmp.ne.s32.totalorder %s30, %s46
      %p48 = scmp.eq.s32.totalorder %s22, 0
      %p49 = por %p47, %p48
      %s51 = sadd.s32 %s50, 1
      %p54 = scmp.eq.s32.totalorder %s16, 1
      %p55 = scmp.ne.s32.totalorder %s50, %s52
      %p56 = scmp.eq.s32.totalorder %s16, 0
      %p57 = por %p55, %p56
      %p58 = scmp.ne.s32.totalorder %s50, %s52
      %p59 = scmp.eq.s32.totalorder %s21, 1
      %p60 = por %p58, %p59
      %p61 = scmp.ne.s32.totalorder %s52, %s53
      %p62 = scmp.eq.s32.totalorder %s21, 0
      %p63 = por %p61, %p62
      %p64 = scmp.ne.s32.totalorder %s52, %s53
      %p65 = scmp.eq.s32.totalorder %s22, 1
      %p66 = por %p64, %p65
      %p68 = scmp.ne.s32.totalorder %s53, %s67
      %p69 = scmp.eq.s32.totalorder %s22, 0
      %p70 = por %p68, %p69
      %s72 = sadd.s32 %s71, 1
      %p75 = scmp.eq.s32.totalorder %s16, 1
      %p76 = scmp.ne.s32.totalorder %s71, %s73
      %p77 = scmp.eq.s32.totalorder %s16, 0
      %p78 = por %p76, %p77
      %p79 = scmp.ne.s32.totalorder %s71, %s73
      %p80 = scmp.eq.s32.totalorder %s21, 1
      %p81 = por %p79, %p80
      %p82 = scmp.ne.s32.totalorder %s73, %s74
      %p83 = scmp.eq.s32.totalorder %s21, 0
      %p84 = por %p82, %p83
      %p85 = scmp.ne.s32.totalorder %s73, %s74
      %p86 = scmp.eq.s32.totalorder %s22, 1
      %p87 = por %p85, %p86
      %p89 = scmp.ne.s32.totalorder %s74, %s88
      %p90 = scmp.eq.s32.totalorder %s22, 0
      %p91 = por %p89, %p90
      %s93 = sadd.s32 %s92, 1
      %p96 = scmp.eq.s32.totalorder %s16, 1
      %p97 = scmp.ne.s32.totalorder %s92, %s94
      %p98 = scmp.eq.s32.totalorder %s16, 0
      %p99 = por %p97, %p98
      %p100 = scmp.ne.s32.totalorder %s92, %s94
      %p101 = scmp.eq.s32.totalorder %s21, 1
      %p102 = por %p100, %p101
      %p103 = scmp.ne.s32.totalorder %s94, %s95
      %p104 = scmp.eq.s32.totalorder %s21, 0
      %p105 = por %p103, %p104
      %p106 = scmp.ne.s32.totalorder %s94, %s95
      %p107 = scmp.eq.s32.totalorder %s22, 1
      %p108 = por %p106, %p107
      %p110 = scmp.ne.s32.totalorder %s95, %s109
      %p111 = scmp.eq.s32.totalorder %s22, 0
      %p112 = por %p110, %p111
      %s114 = sadd.s32 %s113, 1
      %p117 = scmp.eq.s32.totalorder %s16, 1
      %p118 = scmp.ne.s32.totalorder %s113, %s115
      %p119 = scmp.eq.s32.totalorder %s16, 0
      %p120 = por %p118, %p119
      %p121 = scmp.ne.s32.totalorder %s113, %s115
      %p122 = scmp.eq.s32.totalorder %s21, 1
      %p123 = por %p121, %p122
      %p124 = scmp.ne.s32.totalorder %s115, %s116
      %p125 = scmp.eq.s32.totalorder %s21, 0
      %p126 = por %p124, %p125
      %p127 = scmp.ne.s32.totalorder %s115, %s116
      %p128 = scmp.eq.s32.totalorder %s22, 1
      %p129 = por %p127, %p128
      %p131 = scmp.ne.s32.totalorder %s116, %s130
      %p132 = scmp.eq.s32.totalorder %s22, 0
      %p133 = por %p131, %p132
      %s135 = sadd.s32 %s134, 1
      %p138 = scmp.eq.s32.totalorder %s16, 1
      %p139 = scmp.ne.s32.totalorder %s134, %s136
      %p140 = scmp.eq.s32.totalorder %s16, 0
      %p141 = por %p139, %p140
      %p142 = scmp.ne.s32.totalorder %s134, %s136
      %p143 = scmp.eq.s32.totalorder %s21, 1
      %p144 = por %p142, %p143
      %p145 = scmp.ne.s32.totalorder %s136, %s137
      %p146 = scmp.eq.s32.totalorder %s21, 0
      %p147 = por %p145, %p146
      %p148 = scmp.ne.s32.totalorder %s136, %s137
      %p149 = scmp.eq.s32.totalorder %s22, 1
      %p150 = por %p148, %p149
      %p152 = scmp.ne.s32.totalorder %s137, %s151
      %p153 = scmp.eq.s32.totalorder %s22, 0
      %p154 = por %p152, %p153
      %s156 = sadd.s32 %s155, 1
      %p159 = scmp.eq.s32.totalorder %s16, 1
      %p160 = scmp.ne.s32.totalorder %s155, %s157
      %p161 = scmp.eq.s32.totalorder %s16, 0
      %p162 = por %p160, %p161
      %p163 = scmp.ne.s32.totalorder %s155, %s157
      %p164 = scmp.eq.s32.totalorder %s21, 1
      %p165 = por %p163, %p164
      %p166 = scmp.ne.s32.totalorder %s157, %s158
      %p167 = scmp.eq.s32.totalorder %s21, 0
      %p168 = por %p166, %p167
      %p169 = scmp.ne.s32.totalorder %s157, %s158
      %p170 = scmp.eq.s32.totalorder %s22, 1
      %p171 = por %p169, %p170
      %p173 = scmp.ne.s32.totalorder %s158, %s172
      %p174 = scmp.eq.s32.totalorder %s22, 0
      %p175 = por %p173, %p174
      %s176 = ssub.s32 %s16, %s23
      %p177 = scmp.eq.s32.totalorder %s176, 0
      %s179 = sadd.s32 %s178, 1
      %s180 = scalar_select %p177, %s178, %s179
      %p183 = pneg %p177
      %p184 = scmp.eq.s32.totalorder %s16, 1
      %p185 = por %p183, %p184
      %p186 = scmp.ne.s32.totalorder %s178, %s181
      %p187 = scmp.eq.s32.totalorder %s16, 0
      %p188 = por %p186, %p187
      %p189 = scmp.ne.s32.totalorder %s178, %s181
      %p190 = scmp.eq.s32.totalorder %s21, 1
      %p191 = por %p189, %p190
      %p192 = scmp.ne.s32.totalorder %s181, %s182
      %p193 = scmp.eq.s32.totalorder %s21, 0
      %p194 = por %p192, %p193
      %p195 = scmp.ne.s32.totalorder %s181, %s182
      %p196 = scmp.eq.s32.totalorder %s22, 1
      %p197 = por %p195, %p196
      %p199 = scmp.ne.s32.totalorder %s182, %s198
      %p200 = scmp.eq.s32.totalorder %s22, 0
      %p201 = por %p199, %p200
      %p202 = scmp.le.s32.totalorder 1, %s16
      %p203 = scmp.lt.s32.totalorder %s16, 3
      %p204 = pnand %p202, %p203
      %p205 = pneg %p204
      // Predicated region
      $region9: #{neural_net_forward.1} parent=5 // pred_check
        _
      $region10: #{neural_net_forward.1} parent=5 // pred_check_branch
        %207 = sbr.rel (%p204) target = $region12
      $region11: #{neural_net_forward.1} parent=5 // pred_region
        %s208 = ssub.s32 %s16, 1
        // Predicated region
        $region13: #{neural_net_forward.1} parent=11 // pred_check
          %p209 = pneg %p63
        $region14: #{neural_net_forward.1} parent=11 // pred_check_branch
          %211 = sbr.rel (%p209) target = $region16
        $region15: #{neural_net_forward.1} parent=11 // pred_region
          _
        $region16: #{neural_net_forward.1} parent=11 // pred_fallthru
          _
        // Predicated region
        $region17: #{neural_net_forward.1} parent=11 // pred_check
          %p212 = pneg %p84
        $region18: #{neural_net_forward.1} parent=11 // pred_check_branch
          %214 = sbr.rel (%p212) target = $region20
        $region19: #{neural_net_forward.1} parent=11 // pred_region
          _
        $region20: #{neural_net_forward.1} parent=11 // pred_fallthru
          _
        // Predicated region
        $region21: #{neural_net_forward.1} parent=11 // pred_check
          %p215 = pneg %p105
        $region22: #{neural_net_forward.1} parent=11 // pred_check_branch
          %217 = sbr.rel (%p215) target = $region24
        $region23: #{neural_net_forward.1} parent=11 // pred_region
          _
        $region24: #{neural_net_forward.1} parent=11 // pred_fallthru
          _
        // Predicated region
        $region25: #{neural_net_forward.1} parent=11 // pred_check
          %p218 = pneg %p126
        $region26: #{neural_net_forward.1} parent=11 // pred_check_branch
          %220 = sbr.rel (%p218) target = $region28
        $region27: #{neural_net_forward.1} parent=11 // pred_region
          _
        $region28: #{neural_net_forward.1} parent=11 // pred_fallthru
          _
        // Predicated region
        $region29: #{neural_net_forward.1} parent=11 // pred_check
          %p221 = pneg %p147
        $region30: #{neural_net_forward.1} parent=11 // pred_check_branch
          %223 = sbr.rel (%p221) target = $region32
        $region31: #{neural_net_forward.1} parent=11 // pred_region
          _
        $region32: #{neural_net_forward.1} parent=11 // pred_fallthru
          _
        // Predicated region
        $region33: #{neural_net_forward.1} parent=11 // pred_check
          %p224 = pneg %p168
        $region34: #{neural_net_forward.1} parent=11 // pred_check_branch
          %226 = sbr.rel (%p224) target = $region36
        $region35: #{neural_net_forward.1} parent=11 // pred_region
          _
        $region36: #{neural_net_forward.1} parent=11 // pred_fallthru
          _
      $region12: #{neural_net_forward.1} parent=5 // pred_fallthru
        _
      %p227 = scmp.lt.s32.totalorder %s16, 2
      // Predicated region
      $region37: #{neural_net_forward.1} parent=5 // pred_check
        %p228 = pneg %p227
      $region38: #{neural_net_forward.1} parent=5 // pred_check_branch
        %230 = sbr.rel (%p228) target = $region40
      $region39: #{neural_net_forward.1} parent=5 // pred_region
        // Predicated region
        $region41: #{neural_net_forward.1} parent=39 // pred_check
          %p231 = pneg %p36
        $region42: #{neural_net_forward.1} parent=39 // pred_check_branch
          %233 = sbr.rel (%p231) target = $region44
        $region43: #{neural_net_forward.1} parent=39 // pred_region
          %p234 = scmp.lt.s32.totalorder %s16, 1
          %s235 = scalar_select %p234, %s16, 1
          %s236 = smul.addr %s235, 4
          %s237 = scalar_lea.vmem %s0, %s236
        $region44: #{neural_net_forward.1} parent=39 // pred_fallthru
          _
      $region40: #{neural_net_forward.1} parent=5 // pred_fallthru
        _
      %p238 = scmp.le.s32.totalorder 1, %s16
      %p239 = scmp.lt.s32.totalorder %s16, 3
      %p240 = pnand %p238, %p239
      %p241 = pneg %p240
      // Predicated region
      $region45: #{neural_net_forward.1} parent=5 // pred_check
        _
      $region46: #{neural_net_forward.1} parent=5 // pred_check_branch
        %243 = sbr.rel (%p240) target = $region48
      $region47: #{neural_net_forward.1} parent=5 // pred_region
        %s244 = ssub.s32 %s16, 1
        %p245 = scmp.lt.s32.totalorder %s21, 1
        %s246 = scalar_select %p245, %s21, 1
        %s247 = smul.addr %s246, 4
        %s248 = scalar_lea.vmem %s0, %s247
        %p249 = pneg %p42
        %p250 = pneg %p39
        %p251 = pneg %p63
        %p252 = pneg %p60
        %p253 = pneg %p84
        %p254 = pneg %p81
        %p255 = pneg %p105
        %p256 = pneg %p102
        %p257 = pneg %p126
        %p258 = pneg %p123
        %p259 = pneg %p147
        %p260 = pneg %p144
        %p261 = pneg %p168
        %p262 = pneg %p165
        %p263 = pneg %p194
        %p264 = pneg %p191
        %s265 = sand.u32 %s181, 1
        %s266 = scalar_lea.sflag [#allocation3], %s265
        %s267 = sand.u32 %s181, 1
        %s268 = smul.addr %s267, 8
        %s269 = scalar_lea.vmem [#allocation2], %s268
        %p270 = scmp.lt.s32.totalorder %s21, 1
        %s271 = scalar_select %p270, %s21, 1
        %s272 = smul.addr %s271, 4
        %s273 = scalar_lea.vmem %s0, %s272
        %v275 = vld [vmem:[%s273] sm:$0xf]
        %v276 = vld [vmem:[%s1] sm:$0xf]
        %v277 = vld [vmem:[%s1 + $0x4] sm:$0xf]
        %v278 = vld [vmem:[%s1 + $0x8] sm:$0xf]
        %v279 = vld [vmem:[%s1 + $0xc] sm:$0xf]
        %v280 = vld [vmem:[%s1 + $0x10] sm:$0xf]
        %v281 = vld [vmem:[%s1 + $0x14] sm:$0xf]
        %v282 = vld [vmem:[%s1 + $0x18] sm:$0xf]
        %v283 = vld [vmem:[%s1 + $0x1c] sm:$0xf]
        %v284 = vld [vmem:[%s1 + $0x20] sm:$0xf]
        %v285 = vld [vmem:[%s1 + $0x24] sm:$0xf]
        %v286 = vld [vmem:[%s1 + $0x28] sm:$0xf]
        %v287 = vld [vmem:[%s1 + $0x2c] sm:$0xf]
        %v288 = vld [vmem:[%s1 + $0x30] sm:$0xf]
        %v289 = vld [vmem:[%s1 + $0x34] sm:$0xf]
        %v290 = vld [vmem:[%s1 + $0x38] sm:$0xf]
        %v291 = vld [vmem:[%s1 + $0x3c] sm:$0xf]
        %v292 = vld [vmem:[%s2] sm:$0x1]
        %v294 = vlaneseq
        %v295 = vshrl.u32 %v294, 7
        %v296 = vsub.s32 0, %v295
        %v297 = vrot.slane %v292, %v296
        %v315 = vunpack.c.l.b16 %v276
        %v316 = vunpack.c.l.b16 %v277
        %v317 = vunpack.c.l.b16 %v278
        %v318 = vunpack.c.l.b16 %v279
        %v319 = vunpack.c.l.b16 %v280
        %v320 = vunpack.c.l.b16 %v281
        %v321 = vunpack.c.l.b16 %v282
        %v322 = vunpack.c.l.b16 %v283
        %v323 = vunpack.c.l.b16 %v284
        %v324 = vunpack.c.l.b16 %v285
        %v325 = vunpack.c.l.b16 %v286
        %v326 = vunpack.c.l.b16 %v287
        %v327 = vunpack.c.l.b16 %v288
        %v328 = vunpack.c.l.b16 %v289
        %v329 = vunpack.c.l.b16 %v290
        %v330 = vunpack.c.l.b16 %v291
        %v331 = vpack.c.b16 %v316, %v315
        %v332 = vpack.c.b16 %v318, %v317
        %v333 = vpack.c.b16 %v320, %v319
        %v334 = vpack.c.b16 %v322, %v321
        %v335 = vpack.c.b16 %v324, %v323
        %v336 = vpack.c.b16 %v326, %v325
        %v337 = vpack.c.b16 %v328, %v327
        %v338 = vpack.c.b16 %v330, %v329
        %347 = vmatprep.subr.bf16.mxu0 0
        %348 = vmatpush1.bf16.msra.mxu0 %v331
        %349 = vmatprep.subr.bf16.mxu0 0
        %350 = vmatpush1.bf16.msra.mxu0 %v332
        %351 = vmatprep.subr.bf16.mxu0 0
        %352 = vmatpush1.bf16.msra.mxu0 %v333
        %353 = vmatprep.subr.bf16.mxu0 0
        %354 = vmatpush1.bf16.msra.mxu0 %v334
        %355 = vmatprep.subr.bf16.mxu0 0
        %356 = vmatpush1.bf16.msra.mxu0 %v335
        %357 = vmatprep.subr.bf16.mxu0 0
        %358 = vmatpush1.bf16.msra.mxu0 %v336
        %359 = vmatprep.subr.bf16.mxu0 0
        %360 = vmatpush1.bf16.msra.mxu0 %v337
        %361 = vmatprep.subr.bf16.mxu0 0
        %362 = vmatpush1.bf16.msra.mxu0 %v338
        %363 = vmatprep.subr.bf16.mxu0 0
        %364 = vmatpush1.bf16.msra.mxu0 0
        %365 = vmatprep.subr.bf16.mxu0 0
        %366 = vmatpush1.bf16.msra.mxu0 0
        %367 = vmatprep.subr.bf16.mxu0 0
        %368 = vmatpush1.bf16.msra.mxu0 0
        %369 = vmatprep.subr.bf16.mxu0 0
        %370 = vmatpush1.bf16.msra.mxu0 0
        %371 = vmatprep.subr.bf16.mxu0 0
        %372 = vmatpush1.bf16.msra.mxu0 0
        %373 = vmatprep.subr.bf16.mxu0 0
        %374 = vmatpush1.bf16.msra.mxu0 0
        %375 = vmatprep.subr.bf16.mxu0 0
        %376 = vmatpush1.bf16.msra.mxu0 0
        %377 = vmatprep.subr.bf16.mxu0 0
        %378 = vmatpush1.bf16.msra.mxu0 0
        %379 = vmatprep.mubr.bf16.mxu0 0
        %380 = vmatmul.mubr.bf16.gmra.mrb[0].mxu0 %v275
        %v381 = vpop.f32.mrb[0].mxu0
        %v382 = vadd.f32 %v297, %v381
        %v383 = vpop.f32.mrb[0].mxu0
        %v384 = vpop.f32.mrb[0].mxu0
        %v385 = vpop.f32.mrb[0].mxu0
        %386 = vdwg.mxu0
        %v387 = vmax.f32 %v382, 0.0
        %v388 = vpack.c.bf16 %v387, %v387
        %v389 = vld [vmem:[%s3] sm:$0xf]
        %v390 = vld [vmem:[%s3 + $0x4] sm:$0xf]
        %v391 = vld [vmem:[%s3 + $0x8] sm:$0xf]
        %v392 = vld [vmem:[%s3 + $0xc] sm:$0xf]
        %v393 = vld [vmem:[%s3 + $0x10] sm:$0xf]
        %v394 = vld [vmem:[%s3 + $0x14] sm:$0xf]
        %v395 = vld [vmem:[%s3 + $0x18] sm:$0xf]
        %v396 = vld [vmem:[%s3 + $0x1c] sm:$0xf]
        %v397 = vld [vmem:[%s3 + $0x20] sm:$0xf]
        %v398 = vld [vmem:[%s3 + $0x24] sm:$0xf]
        %v399 = vld [vmem:[%s3 + $0x28] sm:$0xf]
        %v400 = vld [vmem:[%s3 + $0x2c] sm:$0xf]
        %v401 = vld [vmem:[%s3 + $0x30] sm:$0xf]
        %v402 = vld [vmem:[%s3 + $0x34] sm:$0xf]
        %v403 = vld [vmem:[%s3 + $0x38] sm:$0xf]
        %v404 = vld [vmem:[%s3 + $0x3c] sm:$0xf]
        %v405 = vld [vmem:[%s4] sm:$0x1]
        %v407 = vlaneseq
        %v408 = vshrl.u32 %v407, 7
        %v409 = vsub.s32 0, %v408
        %v410 = vrot.slane %v405, %v409
        %v428 = vunpack.c.l.b16 %v389
        %v429 = vunpack.c.l.b16 %v390
        %v430 = vunpack.c.l.b16 %v391
        %v431 = vunpack.c.l.b16 %v392
        %v432 = vunpack.c.l.b16 %v393
        %v433 = vunpack.c.l.b16 %v394
        %v434 = vunpack.c.l.b16 %v395
        %v435 = vunpack.c.l.b16 %v396
        %v436 = vunpack.c.l.b16 %v397
        %v437 = vunpack.c.l.b16 %v398
        %v438 = vunpack.c.l.b16 %v399
        %v439 = vunpack.c.l.b16 %v400
        %v440 = vunpack.c.l.b16 %v401
        %v441 = vunpack.c.l.b16 %v402
        %v442 = vunpack.c.l.b16 %v403
        %v443 = vunpack.c.l.b16 %v404
        %v444 = vpack.c.b16 %v429, %v428
        %v445 = vpack.c.b16 %v431, %v430
        %v446 = vpack.c.b16 %v433, %v432
        %v447 = vpack.c.b16 %v435, %v434
        %v448 = vpack.c.b16 %v437, %v436
        %v449 = vpack.c.b16 %v439, %v438
        %v450 = vpack.c.b16 %v441, %v440
        %v451 = vpack.c.b16 %v443, %v442
        %460 = vmatprep.subr.bf16.mxu0 0
        %461 = vmatpush1.bf16.msra.mxu0 %v444
        %462 = vmatprep.subr.bf16.mxu0 0
        %463 = vmatpush1.bf16.msra.mxu0 %v445
        %464 = vmatprep.subr.bf16.mxu0 0
        %465 = vmatpush1.bf16.msra.mxu0 %v446
        %466 = vmatprep.subr.bf16.mxu0 0
        %467 = vmatpush1.bf16.msra.mxu0 %v447
        %468 = vmatprep.subr.bf16.mxu0 0
        %469 = vmatpush1.bf16.msra.mxu0 %v448
        %470 = vmatprep.subr.bf16.mxu0 0
        %471 = vmatpush1.bf16.msra.mxu0 %v449
        %472 = vmatprep.subr.bf16.mxu0 0
        %473 = vmatpush1.bf16.msra.mxu0 %v450
        %474 = vmatprep.subr.bf16.mxu0 0
        %475 = vmatpush1.bf16.msra.mxu0 %v451
        %476 = vmatprep.subr.bf16.mxu0 0
        %477 = vmatpush1.bf16.msra.mxu0 0
        %478 = vmatprep.subr.bf16.mxu0 0
        %479 = vmatpush1.bf16.msra.mxu0 0
        %480 = vmatprep.subr.bf16.mxu0 0
        %481 = vmatpush1.bf16.msra.mxu0 0
        %482 = vmatprep.subr.bf16.mxu0 0
        %483 = vmatpush1.bf16.msra.mxu0 0
        %484 = vmatprep.subr.bf16.mxu0 0
        %485 = vmatpush1.bf16.msra.mxu0 0
        %486 = vmatprep.subr.bf16.mxu0 0
        %487 = vmatpush1.bf16.msra.mxu0 0
        %488 = vmatprep.subr.bf16.mxu0 0
        %489 = vmatpush1.bf16.msra.mxu0 0
        %490 = vmatprep.subr.bf16.mxu0 0
        %491 = vmatpush1.bf16.msra.mxu0 0
        %492 = vmatprep.mubr.bf16.mxu0 0
        %493 = vmatmul.mubr.bf16.gmra.mrb[0].mxu0 %v388
        %v494 = vpop.f32.mrb[0].mxu0
        %v495 = vadd.f32 %v410, %v494
        %v496 = vpop.f32.mrb[0].mxu0
        %v497 = vpop.f32.mrb[0].mxu0
        %v498 = vpop.f32.mrb[0].mxu0
        %499 = vdwg.mxu0
        %v500 = vmax.f32 %v495, 0.0
        %v501 = vpack.c.bf16 %v500, %v500
        %v502 = vld [vmem:[%s5] sm:$0xf]
        %v503 = vld [vmem:[%s5 + $0x4] sm:$0xf]
        %v504 = vld [vmem:[%s5 + $0x8] sm:$0xf]
        %v505 = vld [vmem:[%s5 + $0xc] sm:$0xf]
        %v506 = vld [vmem:[%s5 + $0x10] sm:$0xf]
        %v507 = vld [vmem:[%s5 + $0x14] sm:$0xf]
        %v508 = vld [vmem:[%s5 + $0x18] sm:$0xf]
        %v509 = vld [vmem:[%s5 + $0x1c] sm:$0xf]
        %v510 = vld [vmem:[%s5 + $0x20] sm:$0xf]
        %v511 = vld [vmem:[%s5 + $0x24] sm:$0xf]
        %v512 = vld [vmem:[%s5 + $0x28] sm:$0xf]
        %v513 = vld [vmem:[%s5 + $0x2c] sm:$0xf]
        %v514 = vld [vmem:[%s5 + $0x30] sm:$0xf]
        %v515 = vld [vmem:[%s5 + $0x34] sm:$0xf]
        %v516 = vld [vmem:[%s5 + $0x38] sm:$0xf]
        %v517 = vld [vmem:[%s5 + $0x3c] sm:$0xf]
        %v518 = vld [vmem:[%s6] sm:$0x1]
        %v520 = vlaneseq
        %v521 = vshrl.u32 %v520, 7
        %v522 = vsub.s32 0, %v521
        %v523 = vrot.slane %v518, %v522
        %v541 = vunpack.c.l.b16 %v502
        %v542 = vunpack.c.l.b16 %v503
        %v543 = vunpack.c.l.b16 %v504
        %v544 = vunpack.c.l.b16 %v505
        %v545 = vunpack.c.l.b16 %v506
        %v546 = vunpack.c.l.b16 %v507
        %v547 = vunpack.c.l.b16 %v508
        %v548 = vunpack.c.l.b16 %v509
        %v549 = vunpack.c.l.b16 %v510
        %v550 = vunpack.c.l.b16 %v511
        %v551 = vunpack.c.l.b16 %v512
        %v552 = vunpack.c.l.b16 %v513
        %v553 = vunpack.c.l.b16 %v514
        %v554 = vunpack.c.l.b16 %v515
        %v555 = vunpack.c.l.b16 %v516
        %v556 = vunpack.c.l.b16 %v517
        %v557 = vpack.c.b16 %v542, %v541
        %v558 = vpack.c.b16 %v544, %v543
        %v559 = vpack.c.b16 %v546, %v545
        %v560 = vpack.c.b16 %v548, %v547
        %v561 = vpack.c.b16 %v550, %v549
        %v562 = vpack.c.b16 %v552, %v551
        %v563 = vpack.c.b16 %v554, %v553
        %v564 = vpack.c.b16 %v556, %v555
        %573 = vmatprep.subr.bf16.mxu0 0
        %574 = vmatpush1.bf16.msra.mxu0 %v557
        %575 = vmatprep.subr.bf16.mxu0 0
        %576 = vmatpush1.bf16.msra.mxu0 %v558
        %577 = vmatprep.subr.bf16.mxu0 0
        %578 = vmatpush1.bf16.msra.mxu0 %v559
        %579 = vmatprep.subr.bf16.mxu0 0
        %580 = vmatpush1.bf16.msra.mxu0 %v560
        %581 = vmatprep.subr.bf16.mxu0 0
        %582 = vmatpush1.bf16.msra.mxu0 %v561
        %583 = vmatprep.subr.bf16.mxu0 0
        %584 = vmatpush1.bf16.msra.mxu0 %v562
        %585 = vmatprep.subr.bf16.mxu0 0
        %586 = vmatpush1.bf16.msra.mxu0 %v563
        %587 = vmatprep.subr.bf16.mxu0 0
        %588 = vmatpush1.bf16.msra.mxu0 %v564
        %589 = vmatprep.subr.bf16.mxu0 0
        %590 = vmatpush1.bf16.msra.mxu0 0
        %591 = vmatprep.subr.bf16.mxu0 0
        %592 = vmatpush1.bf16.msra.mxu0 0
        %593 = vmatprep.subr.bf16.mxu0 0
        %594 = vmatpush1.bf16.msra.mxu0 0
        %595 = vmatprep.subr.bf16.mxu0 0
        %596 = vmatpush1.bf16.msra.mxu0 0
        %597 = vmatprep.subr.bf16.mxu0 0
        %598 = vmatpush1.bf16.msra.mxu0 0
        %599 = vmatprep.subr.bf16.mxu0 0
        %600 = vmatpush1.bf16.msra.mxu0 0
        %601 = vmatprep.subr.bf16.mxu0 0
        %602 = vmatpush1.bf16.msra.mxu0 0
        %603 = vmatprep.subr.bf16.mxu0 0
        %604 = vmatpush1.bf16.msra.mxu0 0
        %605 = vmatprep.mubr.bf16.mxu0 0
        %606 = vmatmul.mubr.bf16.gmra.mrb[0].mxu0 %v501
        %v607 = vpop.f32.mrb[0].mxu0
        %v608 = vadd.f32 %v523, %v607
        %v609 = vpop.f32.mrb[0].mxu0
        %v610 = vpop.f32.mrb[0].mxu0
        %v611 = vpop.f32.mrb[0].mxu0
        %612 = vdwg.mxu0
        %613 = vst [vmem:[%s269] sm:$0xff] %v608
        %s614 = sand.u32 %s181, 1
        %s615 = scalar_lea.sflag [#allocation3], %s614
        %s616 = sand.u32 %s181, 1
        %s617 = smul.addr %s616, 8
        %s618 = scalar_lea.vmem [#allocation2], %s617
        // Predicated region
        $region49: #{neural_net_forward.1} parent=47 // pred_check
          %p619 = pneg %p191
        $region50: #{neural_net_forward.1} parent=47 // pred_check_branch
          %621 = sbr.rel (%p619) target = $region52
        $region51: #{neural_net_forward.1} parent=47 // pred_region
          %s623 = ssub.s32 128, 128
          %624 = vsyncadd %s615, %s623
          %s625 = smul.addr %s21, 128
          %s626 = scalar_lea.hbm %s7, %s625
          %s628 = sshll.u32 %s618, 4
          %s629 = int_to_ptr.vmem [resolvable:$true] %s628
          %631 = dma.vmem_to_hbm [thread:$0]  %s629, 128, %s626, %s615
        $region52: #{neural_net_forward.1} parent=47 // pred_fallthru
          _
      $region48: #{neural_net_forward.1} parent=5 // pred_fallthru
        _
      %p632 = scmp.le.s32.totalorder 2, %s16
      // Predicated region
      $region53: #{neural_net_forward.1} parent=5 // pred_check
        %p633 = pneg %p632
      $region54: #{neural_net_forward.1} parent=5 // pred_check_branch
        %635 = sbr.rel (%p633) target = $region56
      $region55: #{neural_net_forward.1} parent=5 // pred_region
        %s636 = ssub.s32 %s16, 2
        // Predicated region
        $region57: #{neural_net_forward.1} parent=55 // pred_check
          %p637 = pneg %p197
        $region58: #{neural_net_forward.1} parent=55 // pred_check_branch
          %639 = sbr.rel (%p637) target = $region60
        $region59: #{neural_net_forward.1} parent=55 // pred_region
          %s640 = sand.u32 %s182, 1
          %s641 = scalar_lea.sflag [#allocation3], %s640
          %s642 = sand.u32 %s182, 1
          %s643 = smul.addr %s642, 8
          %s644 = scalar_lea.vmem [#allocation2], %s643
          %645 = dma.done %s641, 128
        $region60: #{neural_net_forward.1} parent=55 // pred_fallthru
          _
      $region56: #{neural_net_forward.1} parent=5 // pred_fallthru
        _
    $region6: #{neural_net_forward.1} parent=1 // loop_footer
      %s20 = sadd.s32 1, %s16
    $region7: #{neural_net_forward.1} parent=1 // loop_footer_branch
      %15 = sbr.rel target = $region3
    $region8: #{neural_net_forward.1} parent=1 // loop_exit
      _
    %646 = vsyncpa [#allocation3], 1
    %s647 = scalar_lea.sflag [#allocation3], 1
    %648 = vsyncpa %s647, 1

</llo_original>
